<compile_context>
chip_gen: v5e
topology: v5e:2x2
jax: 0.10.0
libtpu: 0.0.40
codegen_flags: <defaults>
</compile_context>

<pallas_src>
import functools
from typing import NamedTuple

import jax
import jax.numpy as jnp
from jax.experimental import pallas as pl
from jax.experimental.pallas import tpu as pltpu


def _round_up(n, m):
    return ((n + m - 1) // m) * m


# -----------------------------------------------------------------------------
# Kernel
# -----------------------------------------------------------------------------
def encoder_kernel(x_ref, w1_ref, b1_ref, wh_ref, bh_ref, out_ref):
    # Hidden layer: bf16 MXU matmul with f32 accumulation; bias + ReLU on the
    # VPU in f32.  `h` stays kernel-local; it never touches HBM.
    h = jnp.dot(x_ref[...], w1_ref[...], preferred_element_type=jnp.float32)
    h = jnp.maximum(h + b1_ref[...], 0.0)

    # Fused mean+std heads: one lane-dense bf16 matmul, one unmasked store.
    # NOTE: the reference module returns the raw linear output for `std`
    # (no positivity constraint), so none is applied here.
    heads = jnp.dot(h.astype(jnp.bfloat16), wh_ref[...],
                    preferred_element_type=jnp.float32)
    out_ref[...] = (heads + bh_ref[...]).astype(out_ref.dtype)


# -----------------------------------------------------------------------------
# One-time parameter packing (hoisted out of the per-call forward)
# -----------------------------------------------------------------------------
class EncoderParams(NamedTuple):
    w1: jax.Array   # [784, hidden_p]      bf16
    b1: jax.Array   # [1, hidden_p]        f32
    wh: jax.Array   # [hidden_p, heads_p]  bf16  (mean | std heads fused)
    bh: jax.Array   # [1, heads_p]         f32


def prepare_encoder_params(w1, b1, wm, bm, ws, bs):
    """Call once (outside the inference loop): fuse the two narrow z-dim heads
    into a single lane-dense matmul, zero-pad feature widths to multiples of
    128 (math-neutral, gives full vregs / unmasked stores), and cast the MXU
    operands to bf16.  Returns (EncoderParams, z_dim)."""
    in_dim, hidden_dim = w1.shape
    z_dim = wm.shape[1]

    w_heads = jnp.concatenate([wm, ws], axis=1)           # [hidden, 2z]
    b_heads = jnp.concatenate([bm, bs], axis=1)           # [1, 2z]

    hidden_p = _round_up(hidden_dim, 128)
    heads_p = _round_up(2 * z_dim, 128)

    w1_p = jnp.pad(w1, ((0, 0), (0, hidden_p - hidden_dim))).astype(jnp.bfloat16)
    b1_p = jnp.pad(b1, ((0, 0), (0, hidden_p - hidden_dim))).astype(jnp.float32)
    wh_p = jnp.pad(
        w_heads, ((0, hidden_p - hidden_dim), (0, heads_p - 2 * z_dim))
    ).astype(jnp.bfloat16)
    bh_p = jnp.pad(b_heads, ((0, 0), (0, heads_p - 2 * z_dim))).astype(jnp.float32)

    return EncoderParams(w1_p, b1_p, wh_p, bh_p), z_dim


# -----------------------------------------------------------------------------
# Forward
# -----------------------------------------------------------------------------
def _tpu_defaults():
    """(block_b, min_grid_steps) chosen per TPU generation at trace time."""
    try:
        kind = jax.devices()[0].device_kind.lower()
    except Exception:  # fall back to safe defaults
        return 256, 1
    # v5e: 4x128^2 MXU, single vector-store slot -> 128-row tiles.
    block_b = 128 if ("v5e" in kind or "v5 lite" in kind or "v5lite" in kind) else 256
    # v7x: 2 TensorCores/chip -> want >= 2 steps on the "parallel" batch axis.
    min_steps = 2 if "v7" in kind else 1
    return block_b, min_steps


def _resident_spec(block_shape):
    """Weight/bias spec: constant index_map -> DMA'd from HBM once and kept
    VMEM-resident across the grid; single-buffered (the block never changes)
    to halve the resident-weight VMEM footprint."""
    try:
        return pl.BlockSpec(block_shape, lambda i: (0, 0),
                            pipeline_mode=pl.Buffered(1))
    except (TypeError, AttributeError):
        # Older JAX without pipeline_mode / Buffered: default double-buffering.
        return pl.BlockSpec(block_shape, lambda i: (0, 0))


def encoder_forward(x, params, *, z_dim, block_b=None):
    """x: [B, 784] f32, params: EncoderParams -> (mean [B, z], std [B, z]) f32."""
    B, in_dim = x.shape
    hidden_p = params.w1.shape[1]
    heads_p = params.wh.shape[1]

    auto_block_b, min_steps = _tpu_defaults()
    if block_b is None:
        block_b = auto_block_b

    # Batch tile: multiple of 8 sublanes; on v7x force >= 2 grid steps so the
    # "parallel" axis actually shards across both TensorCores.
    b8 = _round_up(B, 8)
    tb = min(block_b, b8)
    if min_steps > 1 and b8 > 8:
        tb = min(tb, _round_up(pl.cdiv(b8, min_steps), 8))
    tb = _round_up(max(tb, 8), 8)
    b_pad = _round_up(B, tb)

    # Pad batch + cast to bf16 in one fused XLA pass (halves per-step x DMA).
    x_p = jnp.pad(x, ((0, b_pad - B), (0, 0))).astype(jnp.bfloat16)

    grid = (b_pad // tb,)
    out_p = pl.pallas_call(
        encoder_kernel,
        out_shape=jax.ShapeDtypeStruct((b_pad, heads_p), jnp.float32),
        grid_spec=pltpu.PrefetchScalarGridSpec(
            num_scalar_prefetch=0,
            grid=grid,
            in_specs=[
                # x tiled over batch, double-buffered under the resident
                # weights.  (Raise to pl.Buffered(3) here if profiles show
                # the x DMA exposed on v5e/v6e after the bf16 switch.)
                pl.BlockSpec((tb, in_dim), lambda i: (i, 0)),
                _resident_spec((in_dim, hidden_p)),
                _resident_spec((1, hidden_p)),
                _resident_spec((hidden_p, heads_p)),
                _resident_spec((1, heads_p)),
            ],
            out_specs=pl.BlockSpec((tb, heads_p), lambda i: (i, 0)),
        ),
        compiler_params=pltpu.CompilerParams(
            # Batch tiles are independent: shard across TensorCores (v7x).
            dimension_semantics=("parallel",),
        ),
    )(x_p, params.w1, params.b1, params.wh, params.bh)

    # Slice padded/fused output back to (mean, std).
    mean = out_p[:B, :z_dim]
    std = out_p[:B, z_dim:2 * z_dim]
    return mean, std


# -----------------------------------------------------------------------------
# Helpers / demo
# -----------------------------------------------------------------------------
def init_linear_params(key, fan_in, fan_out):
    """Deterministic init mimicking PyTorch's default U(-1/sqrt(fan_in), ...)."""
    kw, kb = jax.random.split(key)
    bound = 1.0 / jnp.sqrt(fan_in)
    w = jax.random.uniform(kw, (fan_in, fan_out), jnp.float32, -bound, bound)
    b = jax.random.uniform(kb, (1, fan_out), jnp.float32, -bound, bound)
    return w, b


def reference_forward(x, w1, b1, wm, bm, ws, bs):
    h = jnp.maximum(x @ w1 + b1, 0.0)
    return h @ wm + bm, h @ ws + bs


if __name__ == "__main__":
    # Small, module-consistent demo shapes: input dim fixed at 784 by the
    # module; hidden_dim / z_dim are constructor args, chosen small here.
    # (The tiling/dtype choices pay off at production shapes, e.g. hidden=500,
    # z=20, batch >= 128.)
    batch = 2
    in_dim = 784
    hidden_dim = 32
    z_dim = 8

    key = jax.random.PRNGKey(0)
    kx, k1, k2, k3 = jax.random.split(key, 4)

    x = jax.random.normal(kx, (batch, in_dim), jnp.float32)
    w1, b1 = init_linear_params(k1, in_dim, hidden_dim)
    wm, bm = init_linear_params(k2, hidden_dim, z_dim)
    ws, bs = init_linear_params(k3, hidden_dim, z_dim)

    # One-time parameter packing (concat / pad / bf16 cast), hoisted out of
    # the jitted per-call forward path.
    params, z = prepare_encoder_params(w1, b1, wm, bm, ws, bs)
    params = jax.block_until_ready(params)

    encoder_jit = jax.jit(functools.partial(encoder_forward, z_dim=z))
    mean, std = jax.block_until_ready(encoder_jit(x, params))

    # Correctness vs. pure-JAX f32 reference (bf16 MXU operands -> ~1e-2 tol).
    mean_ref, std_ref = reference_forward(x, w1, b1, wm, bm, ws, bs)
    assert mean.shape == (batch, z_dim) and std.shape == (batch, z_dim)
    assert jnp.allclose(mean, mean_ref, atol=2e-2, rtol=2e-2), \
        float(jnp.max(jnp.abs(mean - mean_ref)))
    assert jnp.allclose(std, std_ref, atol=2e-2, rtol=2e-2), \
        float(jnp.max(jnp.abs(std - std_ref)))

    print("KERNEL_OK")
</pallas_src>

<mosaic_0001>
module attributes {stable_mosaic.version = 11 : i64} {
  func.func @encoder_kernel(%arg0: i32, %arg1: memref<8x784xbf16, #tpu.memory_space<vmem>>, %arg2: memref<784x128xbf16, #tpu.memory_space<vmem>>, %arg3: memref<1x128xf32, #tpu.memory_space<vmem>>, %arg4: memref<128x128xbf16, #tpu.memory_space<vmem>>, %arg5: memref<1x128xf32, #tpu.memory_space<vmem>>, %arg6: memref<8x128xf32, #tpu.memory_space<vmem>>) attributes {dimension_semantics = [#tpu.dimension_semantics<parallel>], iteration_bounds = array<i64: 1>, scalar_prefetch = 0 : i64, scratch_operands = 0 : i64, tpu.core_type = #tpu.core_type<tc>, window_params = [{transform_indices = @transform_0, window_bounds = array<i64: 8, 784>}, {pipeline_mode = #tpu.pipeline_mode<synchronous>, transform_indices = @transform_1, window_bounds = array<i64: 784, 128>}, {pipeline_mode = #tpu.pipeline_mode<synchronous>, transform_indices = @transform_2, window_bounds = array<i64: 1, 128>}, {pipeline_mode = #tpu.pipeline_mode<synchronous>, transform_indices = @transform_3, window_bounds = array<i64: 128, 128>}, {pipeline_mode = #tpu.pipeline_mode<synchronous>, transform_indices = @transform_4, window_bounds = array<i64: 1, 128>}, {transform_indices = @transform_5, window_bounds = array<i64: 8, 128>}]} {
    %c0 = arith.constant 0 : index
    %c0_0 = arith.constant 0 : index
    %0 = vector.load %arg1[%c0, %c0_0] : memref<8x784xbf16, #tpu.memory_space<vmem>>, vector<8x784xbf16>
    %c0_1 = arith.constant 0 : index
    %c0_2 = arith.constant 0 : index
    %1 = vector.load %arg2[%c0_1, %c0_2] : memref<784x128xbf16, #tpu.memory_space<vmem>>, vector<784x128xbf16>
    %cst = arith.constant dense<0.000000e+00> : vector<8x128xf32>
    %2 = tpu.matmul %0, %1, %cst {dimension_numbers = #tpu.dot_dimension_numbers<[1], [0], [0], [1], [0, 0, 1, 1], [], []>} : vector<8x784xbf16>, vector<784x128xbf16>, vector<8x128xf32> -> vector<8x128xf32>
    %c0_3 = arith.constant 0 : index
    %c0_4 = arith.constant 0 : index
    %3 = vector.load %arg3[%c0_3, %c0_4] : memref<1x128xf32, #tpu.memory_space<vmem>>, vector<1x128xf32>
    %4 = vector.broadcast %3 : vector<1x128xf32> to vector<8x128xf32>
    %5 = arith.addf %2, %4 : vector<8x128xf32>
    %cst_5 = arith.constant 0.000000e+00 : f32
    %6 = vector.broadcast %cst_5 : f32 to vector<8x128xf32>
    %7 = arith.maximumf %5, %6 : vector<8x128xf32>
    %8 = arith.truncf %7 : vector<8x128xf32> to vector<8x128xbf16>
    %c0_6 = arith.constant 0 : index
    %c0_7 = arith.constant 0 : index
    %9 = vector.load %arg4[%c0_6, %c0_7] : memref<128x128xbf16, #tpu.memory_space<vmem>>, vector<128x128xbf16>
    %cst_8 = arith.constant dense<0.000000e+00> : vector<8x128xf32>
    %10 = tpu.matmul %8, %9, %cst_8 {dimension_numbers = #tpu.dot_dimension_numbers<[1], [0], [0], [1], [0, 0, 1, 1], [], []>} : vector<8x128xbf16>, vector<128x128xbf16>, vector<8x128xf32> -> vector<8x128xf32>
    %c0_9 = arith.constant 0 : index
    %c0_10 = arith.constant 0 : index
    %11 = vector.load %arg5[%c0_9, %c0_10] : memref<1x128xf32, #tpu.memory_space<vmem>>, vector<1x128xf32>
    %12 = vector.broadcast %11 : vector<1x128xf32> to vector<8x128xf32>
    %13 = arith.addf %10, %12 : vector<8x128xf32>
    %c0_11 = arith.constant 0 : index
    %c0_12 = arith.constant 0 : index
    %14 = vector.load %arg6[%c0_11, %c0_12] : memref<8x128xf32, #tpu.memory_space<vmem>>, vector<8x128xf32>
    tpu.vector_store %arg6[%c0_11, %c0_12], %13 {strides = array<i32>} : memref<8x128xf32, #tpu.memory_space<vmem>>, vector<8x128xf32>,
    return
  }
  func.func @transform_0(%arg0: i32) -> (i32, i32) {
    %c0_i32 = arith.constant 0 : i32
    %c0_i32_0 = arith.constant 0 : i32
    return %arg0, %c0_i32 : i32, i32
  }
  func.func @transform_1(%arg0: i32) -> (i32, i32) {
    %c0_i32 = arith.constant 0 : i32
    %c0_i32_0 = arith.constant 0 : i32
    %c0_i32_1 = arith.constant 0 : i32
    return %c0_i32, %c0_i32_0 : i32, i32
  }
  func.func @transform_2(%arg0: i32) -> (i32, i32) {
    %c0_i32 = arith.constant 0 : i32
    %c0_i32_0 = arith.constant 0 : i32
    %c0_i32_1 = arith.constant 0 : i32
    return %c0_i32, %c0_i32_0 : i32, i32
  }
  func.func @transform_3(%arg0: i32) -> (i32, i32) {
    %c0_i32 = arith.constant 0 : i32
    %c0_i32_0 = arith.constant 0 : i32
    %c0_i32_1 = arith.constant 0 : i32
    return %c0_i32, %c0_i32_0 : i32, i32
  }
  func.func @transform_4(%arg0: i32) -> (i32, i32) {
    %c0_i32 = arith.constant 0 : i32
    %c0_i32_0 = arith.constant 0 : i32
    %c0_i32_1 = arith.constant 0 : i32
    return %c0_i32, %c0_i32_0 : i32, i32
  }
  func.func @transform_5(%arg0: i32) -> (i32, i32) {
    %c0_i32 = arith.constant 0 : i32
    %c0_i32_0 = arith.constant 0 : i32
    return %arg0, %c0_i32 : i32, i32
  }
}

</mosaic_0001>

<llo_original>
// kernel: encoder_forward.1
$region0: #{encoder_forward.1}
  #allocation0 [shape = 'u32[]', space=smem, size = 0x4, offset = 0x4, fixed_abs, tag = 'smem constant byte address 0x4 - core index']
  #allocation1 [shape = 'u32[72,128]{1,0:T(1,128)}', space=vmem, size = 0x9000, scoped, tag = 'internal scratch']
  %s0 = inlined_call_operand.vmem [shape: bf16[8,784], index: 0, kind: input, shape index: {}]
  %s1 = inlined_call_operand.hbm [shape: bf16[784,128], index: 1, kind: input, shape index: {}]
  %s2 = inlined_call_operand.vmem [shape: f32[1,128], index: 2, kind: input, shape index: {}]
  %s3 = inlined_call_operand.hbm [shape: bf16[128,128], index: 3, kind: input, shape index: {}]
  %s4 = inlined_call_operand.vmem [shape: f32[1,128], index: 4, kind: input, shape index: {}]
  %s5 = inlined_call_operand.vmem [shape: f32[8,128], index: 5, kind: output, shape index: {}]
  %s6 = sld [smem:[#allocation0]]
  $region38: #{encoder_forward.1} parent=0
    _
  %s8 = ssub.s32 1, %s6
  %s9 = scalar_select 0, %s8, %s6
  $region1: #{encoder_forward.1} parent=0
    #allocation2 [shape = 'u8[200704]{0}', space=vmem, size = 0x31000, scoped, tag = 'input window, operand 1, single buffered']
    #allocation3 [shape = 's32[1]{0}', space=sflag, size = 0x4, scoped, tag = 'scoped memory for encoder_forward.1']
    #allocation4 [shape = 'u8[32768]{0}', space=vmem, size = 0x8000, scoped, tag = 'input window, operand 3, single buffered']
    #allocation5 [shape = 's32[1]{0}', space=sflag, size = 0x4, scoped, tag = 'scoped memory for encoder_forward.1']
    %10 = vsyncpa [#allocation3], 0
    %11 = vsyncpa [#allocation5], 0
    // Predicated region
    $region2: #{encoder_forward.1} parent=1 // pred_check
      _
    $region3: #{encoder_forward.1} parent=1 // pred_check_branch
      %13 = sbr.rel (0) target = $region5
    $region4: #{encoder_forward.1} parent=1 // pred_region
      _
    $region5: #{encoder_forward.1} parent=1 // pred_fallthru
      _
    // Predicated region
    $region6: #{encoder_forward.1} parent=1 // pred_check
      _
    $region7: #{encoder_forward.1} parent=1 // pred_check_branch
      %15 = sbr.rel (0) target = $region9
    $region8: #{encoder_forward.1} parent=1 // pred_region
      %17 = vsyncadd [#allocation3], 0
      %s18 = sshll.u32 %s1, 4
      %s19 = int_to_ptr.hbm [resolvable:$true] %s18
      %s20 = sshll.u32 [#allocation2], 4
      %s21 = int_to_ptr.vmem [resolvable:$true] %s20
      %26 = dma.hbm_to_vmem [thread:$0]  %s19, 6272, %s21, [#allocation3], 64, 64, 4
    $region9: #{encoder_forward.1} parent=1 // pred_fallthru
      _
    // Predicated region
    $region10: #{encoder_forward.1} parent=1 // pred_check
      _
    $region11: #{encoder_forward.1} parent=1 // pred_check_branch
      %28 = sbr.rel (0) target = $region13
    $region12: #{encoder_forward.1} parent=1 // pred_region
      _
    $region13: #{encoder_forward.1} parent=1 // pred_fallthru
      _
    // Predicated region
    $region14: #{encoder_forward.1} parent=1 // pred_check
      _
    $region15: #{encoder_forward.1} parent=1 // pred_check_branch
      %30 = sbr.rel (0) target = $region17
    $region16: #{encoder_forward.1} parent=1 // pred_region
      %32 = vsyncadd [#allocation5], 0
      %s33 = sshll.u32 %s3, 4
      %s34 = int_to_ptr.hbm [resolvable:$true] %s33
      %s35 = sshll.u32 [#allocation4], 4
      %s36 = int_to_ptr.vmem [resolvable:$true] %s35
      %41 = dma.hbm_to_vmem [thread:$0]  %s34, 1024, %s36, [#allocation5], 64, 64, 4
    $region17: #{encoder_forward.1} parent=1 // pred_fallthru
      _
    // Predicated region
    $region18: #{encoder_forward.1} parent=1 // pred_check
      _
    $region19: #{encoder_forward.1} parent=1 // pred_check_branch
      %43 = sbr.rel (0) target = $region21
    $region20: #{encoder_forward.1} parent=1 // pred_region
      _
    $region21: #{encoder_forward.1} parent=1 // pred_fallthru
      _
    // Predicated region
    $region22: #{encoder_forward.1} parent=1 // pred_check
      _
    $region23: #{encoder_forward.1} parent=1 // pred_check_branch
      %45 = sbr.rel (0) target = $region25
    $region24: #{encoder_forward.1} parent=1 // pred_region
      %47 = dma.done [#allocation3], 6272
    $region25: #{encoder_forward.1} parent=1 // pred_fallthru
      _
    // Predicated region
    $region26: #{encoder_forward.1} parent=1 // pred_check
      _
    $region27: #{encoder_forward.1} parent=1 // pred_check_branch
      %49 = sbr.rel (0) target = $region29
    $region28: #{encoder_forward.1} parent=1 // pred_region
      %51 = dma.done [#allocation5], 1024
    $region29: #{encoder_forward.1} parent=1 // pred_fallthru
      _
    %v53 = vld [vmem:[%s0] sm:$0xff]
    %v54 = vld [vmem:[%s0 + $0x8] sm:$0xff]
    %v55 = vld [vmem:[%s0 + $0x10] sm:$0xff]
    %v56 = vld [vmem:[%s0 + $0x18] sm:$0xf]
    %v57 = vld [vmem:[#allocation2] sm:$0xf]
    %v58 = vld [vmem:[#allocation2 + $0x4] sm:$0xf]
    %v59 = vld [vmem:[#allocation2 + $0x8] sm:$0xf]
    %v60 = vld [vmem:[#allocation2 + $0xc] sm:$0xf]
    %v61 = vld [vmem:[#allocation2 + $0x10] sm:$0xf]
    %v62 = vld [vmem:[#allocation2 + $0x14] sm:$0xf]
    %v63 = vld [vmem:[#allocation2 + $0x18] sm:$0xf]
    %v64 = vld [vmem:[#allocation2 + $0x1c] sm:$0xf]
    %v65 = vld [vmem:[#allocation2 + $0x20] sm:$0xf]
    %v66 = vld [vmem:[#allocation2 + $0x24] sm:$0xf]
    %v67 = vld [vmem:[#allocation2 + $0x28] sm:$0xf]
    %v68 = vld [vmem:[#allocation2 + $0x2c] sm:$0xf]
    %v69 = vld [vmem:[#allocation2 + $0x30] sm:$0xf]
    %v70 = vld [vmem:[#allocation2 + $0x34] sm:$0xf]
    %v71 = vld [vmem:[#allocation2 + $0x38] sm:$0xf]
    %v72 = vld [vmem:[#allocation2 + $0x3c] sm:$0xf]
    %v73 = vld [vmem:[#allocation2 + $0x40] sm:$0xf]
    %v74 = vld [vmem:[#allocation2 + $0x44] sm:$0xf]
    %v75 = vld [vmem:[#allocation2 + $0x48] sm:$0xf]
    %v76 = vld [vmem:[#allocation2 + $0x4c] sm:$0xf]
    %v77 = vld [vmem:[#allocation2 + $0x50] sm:$0xf]
    %v78 = vld [vmem:[#allocation2 + $0x54] sm:$0xf]
    %v79 = vld [vmem:[#allocation2 + $0x58] sm:$0xf]
    %v80 = vld [vmem:[#allocation2 + $0x5c] sm:$0xf]
    %v81 = vld [vmem:[#allocation2 + $0x60] sm:$0xf]
    %v82 = vld [vmem:[#allocation2 + $0x64] sm:$0xf]
    %v83 = vld [vmem:[#allocation2 + $0x68] sm:$0xf]
    %v84 = vld [vmem:[#allocation2 + $0x6c] sm:$0xf]
    %v85 = vld [vmem:[#allocation2 + $0x70] sm:$0xf]
    %v86 = vld [vmem:[#allocation2 + $0x74] sm:$0xf]
    %v87 = vld [vmem:[#allocation2 + $0x78] sm:$0xf]
    %v88 = vld [vmem:[#allocation2 + $0x7c] sm:$0xf]
    %v89 = vld [vmem:[#allocation2 + $0x80] sm:$0xf]
    %v90 = vld [vmem:[#allocation2 + $0x84] sm:$0xf]
    %v91 = vld [vmem:[#allocation2 + $0x88] sm:$0xf]
    %v92 = vld [vmem:[#allocation2 + $0x8c] sm:$0xf]
    %v93 = vld [vmem:[#allocation2 + $0x90] sm:$0xf]
    %v94 = vld [vmem:[#allocation2 + $0x94] sm:$0xf]
    %v95 = vld [vmem:[#allocation2 + $0x98] sm:$0xf]
    %v96 = vld [vmem:[#allocation2 + $0x9c] sm:$0xf]
    %v97 = vld [vmem:[#allocation2 + $0xa0] sm:$0xf]
    %v98 = vld [vmem:[#allocation2 + $0xa4] sm:$0xf]
    %v99 = vld [vmem:[#allocation2 + $0xa8] sm:$0xf]
    %v100 = vld [vmem:[#allocation2 + $0xac] sm:$0xf]
    %v101 = vld [vmem:[#allocation2 + $0xb0] sm:$0xf]
    %v102 = vld [vmem:[#allocation2 + $0xb4] sm:$0xf]
    %v103 = vld [vmem:[#allocation2 + $0xb8] sm:$0xf]
    %v104 = vld [vmem:[#allocation2 + $0xbc] sm:$0xf]
    %v105 = vld [vmem:[#allocation2 + $0xc0] sm:$0xf]
    %v106 = vld [vmem:[#allocation2 + $0xc4] sm:$0xf]
    %v107 = vld [vmem:[#allocation2 + $0xc8] sm:$0xf]
    %v108 = vld [vmem:[#allocation2 + $0xcc] sm:$0xf]
    %v109 = vld [vmem:[#allocation2 + $0xd0] sm:$0xf]
    %v110 = vld [vmem:[#allocation2 + $0xd4] sm:$0xf]
    %v111 = vld [vmem:[#allocation2 + $0xd8] sm:$0xf]
    %v112 = vld [vmem:[#allocation2 + $0xdc] sm:$0xf]
    %v113 = vld [vmem:[#allocation2 + $0xe0] sm:$0xf]
    %v114 = vld [vmem:[#allocation2 + $0xe4] sm:$0xf]
    %v115 = vld [vmem:[#allocation2 + $0xe8] sm:$0xf]
    %v116 = vld [vmem:[#allocation2 + $0xec] sm:$0xf]
    %v117 = vld [vmem:[#allocation2 + $0xf0] sm:$0xf]
    %v118 = vld [vmem:[#allocation2 + $0xf4] sm:$0xf]
    %v119 = vld [vmem:[#allocation2 + $0xf8] sm:$0xf]
    %v120 = vld [vmem:[#allocation2 + $0xfc] sm:$0xf]
    %v121 = vld [vmem:[#allocation2 + $0x100] sm:$0xf]
    %v122 = vld [vmem:[#allocation2 + $0x104] sm:$0xf]
    %v123 = vld [vmem:[#allocation2 + $0x108] sm:$0xf]
    %v124 = vld [vmem:[#allocation2 + $0x10c] sm:$0xf]
    %v125 = vld [vmem:[#allocation2 + $0x110] sm:$0xf]
    %v126 = vld [vmem:[#allocation2 + $0x114] sm:$0xf]
    %v127 = vld [vmem:[#allocation2 + $0x118] sm:$0xf]
    %v128 = vld [vmem:[#allocation2 + $0x11c] sm:$0xf]
    %v129 = vld [vmem:[#allocation2 + $0x120] sm:$0xf]
    %v130 = vld [vmem:[#allocation2 + $0x124] sm:$0xf]
    %v131 = vld [vmem:[#allocation2 + $0x128] sm:$0xf]
    %v132 = vld [vmem:[#allocation2 + $0x12c] sm:$0xf]
    %v133 = vld [vmem:[#allocation2 + $0x130] sm:$0xf]
    %v134 = vld [vmem:[#allocation2 + $0x134] sm:$0xf]
    %v135 = vld [vmem:[#allocation2 + $0x138] sm:$0xf]
    %v136 = vld [vmem:[#allocation2 + $0x13c] sm:$0xf]
    %v137 = vld [vmem:[#allocation2 + $0x140] sm:$0xf]
    %v138 = vld [vmem:[#allocation2 + $0x144] sm:$0xf]
    %v139 = vld [vmem:[#allocation2 + $0x148] sm:$0xf]
    %v140 = vld [vmem:[#allocation2 + $0x14c] sm:$0xf]
    %v141 = vld [vmem:[#allocation2 + $0x150] sm:$0xf]
    %v142 = vld [vmem:[#allocation2 + $0x154] sm:$0xf]
    %v143 = vld [vmem:[#allocation2 + $0x158] sm:$0xf]
    %v144 = vld [vmem:[#allocation2 + $0x15c] sm:$0xf]
    %v145 = vld [vmem:[#allocation2 + $0x160] sm:$0xf]
    %v146 = vld [vmem:[#allocation2 + $0x164] sm:$0xf]
    %v147 = vld [vmem:[#allocation2 + $0x168] sm:$0xf]
    %v148 = vld [vmem:[#allocation2 + $0x16c] sm:$0xf]
    %v149 = vld [vmem:[#allocation2 + $0x170] sm:$0xf]
    %v150 = vld [vmem:[#allocation2 + $0x174] sm:$0xf]
    %v151 = vld [vmem:[#allocation2 + $0x178] sm:$0xf]
    %v152 = vld [vmem:[#allocation2 + $0x17c] sm:$0xf]
    %v153 = vld [vmem:[#allocation2 + $0x180] sm:$0xf]
    %v154 = vld [vmem:[#allocation2 + $0x184] sm:$0xf]
    %v155 = vld [vmem:[%s2] sm:$0x1]
    %v157 = vperm.slane %v155, 0
    %v163 = vunpack.c.l.b16 %v53
    %v164 = vunpack.c.h.b16 %v53
    %v165 = vunpack.c.l.b16 %v54
    %v166 = vunpack.c.h.b16 %v54
    %v167 = vunpack.c.l.b16 %v55
    %v168 = vunpack.c.h.b16 %v55
    %v169 = vunpack.c.l.b16 %v56
    %v170 = vpack.c.b16 %v163, %v163
    %v171 = vpack.c.b16 %v164, %v164
    %v172 = vpack.c.b16 %v165, %v165
    %v173 = vpack.c.b16 %v166, %v166
    %v174 = vpack.c.b16 %v167, %v167
    %v175 = vpack.c.b16 %v168, %v168
    %v176 = vpack.c.b16 %v169, %v169
    %v281 = vunpack.c.l.b16 %v57
    %v282 = vunpack.c.l.b16 %v58
    %v283 = vunpack.c.l.b16 %v59
    %v284 = vunpack.c.l.b16 %v60
    %v285 = vunpack.c.l.b16 %v61
    %v286 = vunpack.c.l.b16 %v62
    %v287 = vunpack.c.l.b16 %v63
    %v288 = vunpack.c.l.b16 %v64
    %v289 = vunpack.c.l.b16 %v65
    %v290 = vunpack.c.l.b16 %v66
    %v291 = vunpack.c.l.b16 %v67
    %v292 = vunpack.c.l.b16 %v68
    %v293 = vunpack.c.l.b16 %v69
    %v294 = vunpack.c.l.b16 %v70
    %v295 = vunpack.c.l.b16 %v71
    %v296 = vunpack.c.l.b16 %v72
    %v297 = vunpack.c.l.b16 %v73
    %v298 = vunpack.c.l.b16 %v74
    %v299 = vunpack.c.l.b16 %v75
    %v300 = vunpack.c.l.b16 %v76
    %v301 = vunpack.c.l.b16 %v77
    %v302 = vunpack.c.l.b16 %v78
    %v303 = vunpack.c.l.b16 %v79
    %v304 = vunpack.c.l.b16 %v80
    %v305 = vunpack.c.l.b16 %v81
    %v306 = vunpack.c.l.b16 %v82
    %v307 = vunpack.c.l.b16 %v83
    %v308 = vunpack.c.l.b16 %v84
    %v309 = vunpack.c.l.b16 %v85
    %v310 = vunpack.c.l.b16 %v86
    %v311 = vunpack.c.l.b16 %v87
    %v312 = vunpack.c.l.b16 %v88
    %v313 = vunpack.c.l.b16 %v89
    %v314 = vunpack.c.l.b16 %v90
    %v315 = vunpack.c.l.b16 %v91
    %v316 = vunpack.c.l.b16 %v92
    %v317 = vunpack.c.l.b16 %v93
    %v318 = vunpack.c.l.b16 %v94
    %v319 = vunpack.c.l.b16 %v95
    %v320 = vunpack.c.l.b16 %v96
    %v321 = vunpack.c.l.b16 %v97
    %v322 = vunpack.c.l.b16 %v98
    %v323 = vunpack.c.l.b16 %v99
    %v324 = vunpack.c.l.b16 %v100
    %v325 = vunpack.c.l.b16 %v101
    %v326 = vunpack.c.l.b16 %v102
    %v327 = vunpack.c.l.b16 %v103
    %v328 = vunpack.c.l.b16 %v104
    %v329 = vunpack.c.l.b16 %v105
    %v330 = vunpack.c.l.b16 %v106
    %v331 = vunpack.c.l.b16 %v107
    %v332 = vunpack.c.l.b16 %v108
    %v333 = vunpack.c.l.b16 %v109
    %v334 = vunpack.c.l.b16 %v110
    %v335 = vunpack.c.l.b16 %v111
    %v336 = vunpack.c.l.b16 %v112
    %v337 = vunpack.c.l.b16 %v113
    %v338 = vunpack.c.l.b16 %v114
    %v339 = vunpack.c.l.b16 %v115
    %v340 = vunpack.c.l.b16 %v116
    %v341 = vunpack.c.l.b16 %v117
    %v342 = vunpack.c.l.b16 %v118
    %v343 = vunpack.c.l.b16 %v119
    %v344 = vunpack.c.l.b16 %v120
    %v345 = vunpack.c.l.b16 %v121
    %v346 = vunpack.c.l.b16 %v122
    %v347 = vunpack.c.l.b16 %v123
    %v348 = vunpack.c.l.b16 %v124
    %v349 = vunpack.c.l.b16 %v125
    %v350 = vunpack.c.l.b16 %v126
    %v351 = vunpack.c.l.b16 %v127
    %v352 = vunpack.c.l.b16 %v128
    %v353 = vunpack.c.l.b16 %v129
    %v354 = vunpack.c.l.b16 %v130
    %v355 = vunpack.c.l.b16 %v131
    %v356 = vunpack.c.l.b16 %v132
    %v357 = vunpack.c.l.b16 %v133
    %v358 = vunpack.c.l.b16 %v134
    %v359 = vunpack.c.l.b16 %v135
    %v360 = vunpack.c.l.b16 %v136
    %v361 = vunpack.c.l.b16 %v137
    %v362 = vunpack.c.l.b16 %v138
    %v363 = vunpack.c.l.b16 %v139
    %v364 = vunpack.c.l.b16 %v140
    %v365 = vunpack.c.l.b16 %v141
    %v366 = vunpack.c.l.b16 %v142
    %v367 = vunpack.c.l.b16 %v143
    %v368 = vunpack.c.l.b16 %v144
    %v369 = vunpack.c.l.b16 %v145
    %v370 = vunpack.c.l.b16 %v146
    %v371 = vunpack.c.l.b16 %v147
    %v372 = vunpack.c.l.b16 %v148
    %v373 = vunpack.c.l.b16 %v149
    %v374 = vunpack.c.l.b16 %v150
    %v375 = vunpack.c.l.b16 %v151
    %v376 = vunpack.c.l.b16 %v152
    %v377 = vunpack.c.l.b16 %v153
    %v378 = vunpack.c.l.b16 %v154
    %v379 = vpack.c.b16 %v282, %v281
    %v380 = vpack.c.b16 %v284, %v283
    %v381 = vpack.c.b16 %v286, %v285
    %v382 = vpack.c.b16 %v288, %v287
    %v383 = vpack.c.b16 %v290, %v289
    %v384 = vpack.c.b16 %v292, %v291
    %v385 = vpack.c.b16 %v294, %v293
    %v386 = vpack.c.b16 %v296, %v295
    %v387 = vpack.c.b16 %v298, %v297
    %v388 = vpack.c.b16 %v300, %v299
    %v389 = vpack.c.b16 %v302, %v301
    %v390 = vpack.c.b16 %v304, %v303
    %v391 = vpack.c.b16 %v306, %v305
    %v392 = vpack.c.b16 %v308, %v307
    %v393 = vpack.c.b16 %v310, %v309
    %v394 = vpack.c.b16 %v312, %v311
    %v395 = vpack.c.b16 %v314, %v313
    %v396 = vpack.c.b16 %v316, %v315
    %v397 = vpack.c.b16 %v318, %v317
    %v398 = vpack.c.b16 %v320, %v319
    %v399 = vpack.c.b16 %v322, %v321
    %v400 = vpack.c.b16 %v324, %v323
    %v401 = vpack.c.b16 %v326, %v325
    %v402 = vpack.c.b16 %v328, %v327
    %v403 = vpack.c.b16 %v330, %v329
    %v404 = vpack.c.b16 %v332, %v331
    %v405 = vpack.c.b16 %v334, %v333
    %v406 = vpack.c.b16 %v336, %v335
    %v407 = vpack.c.b16 %v338, %v337
    %v408 = vpack.c.b16 %v340, %v339
    %v409 = vpack.c.b16 %v342, %v341
    %v410 = vpack.c.b16 %v344, %v343
    %v411 = vpack.c.b16 %v346, %v345
    %v412 = vpack.c.b16 %v348, %v347
    %v413 = vpack.c.b16 %v350, %v349
    %v414 = vpack.c.b16 %v352, %v351
    %v415 = vpack.c.b16 %v354, %v353
    %v416 = vpack.c.b16 %v356, %v355
    %v417 = vpack.c.b16 %v358, %v357
    %v418 = vpack.c.b16 %v360, %v359
    %v419 = vpack.c.b16 %v362, %v361
    %v420 = vpack.c.b16 %v364, %v363
    %v421 = vpack.c.b16 %v366, %v365
    %v422 = vpack.c.b16 %v368, %v367
    %v423 = vpack.c.b16 %v370, %v369
    %v424 = vpack.c.b16 %v372, %v371
    %v425 = vpack.c.b16 %v374, %v373
    %v426 = vpack.c.b16 %v376, %v375
    %v427 = vpack.c.b16 %v378, %v377
    %vm477 = vcmask 130048
    %v479 = vsel %vm477, %v176, 0
    %481 = vmatpush.bf16.msra.mxu0 %v386
    %482 = vmatpush.bf16.msra.mxu0 %v385
    %483 = vmatpush.bf16.msra.mxu0 %v384
    %484 = vmatpush.bf16.msra.mxu0 %v383
    %485 = vmatpush.bf16.msra.mxu0 %v382
    %486 = vmatpush.bf16.msra.mxu0 %v381
    %487 = vmatpush.bf16.msra.mxu0 %v380
    %488 = vmatpush.bf16.msra.mxu0 %v379
    %489 = vmatmul.bf16.gmra.mxu0 %v170
    %v490 = vpop.f32.mrf.mxu0
    %v491 = vadd.f32 %v157, %v490
    %v492 = vpop.f32.mrf.mxu0
    %493 = vdwg.mxu0
    %494 = vmatpush.bf16.msra.mxu0 %v394
    %495 = vmatpush.bf16.msra.mxu0 %v393
    %496 = vmatpush.bf16.msra.mxu0 %v392
    %497 = vmatpush.bf16.msra.mxu0 %v391
    %498 = vmatpush.bf16.msra.mxu0 %v390
    %499 = vmatpush.bf16.msra.mxu0 %v389
    %500 = vmatpush.bf16.msra.mxu0 %v388
    %501 = vmatpush.bf16.msra.mxu0 %v387
    %502 = vmatmul.bf16.gmra.mxu0 %v171
    %v503 = vpop.f32.mrf.mxu0
    %v504 = vadd.f32 %v491, %v503
    %v505 = vpop.f32.mrf.mxu0
    %506 = vdwg.mxu0
    %507 = vmatpush.bf16.msra.mxu0 %v402
    %508 = vmatpush.bf16.msra.mxu0 %v401
    %509 = vmatpush.bf16.msra.mxu0 %v400
    %510 = vmatpush.bf16.msra.mxu0 %v399
    %511 = vmatpush.bf16.msra.mxu0 %v398
    %512 = vmatpush.bf16.msra.mxu0 %v397
    %513 = vmatpush.bf16.msra.mxu0 %v396
    %514 = vmatpush.bf16.msra.mxu0 %v395
    %515 = vmatmul.bf16.gmra.mxu0 %v172
    %v516 = vpop.f32.mrf.mxu0
    %v517 = vadd.f32 %v504, %v516
    %v518 = vpop.f32.mrf.mxu0
    %519 = vdwg.mxu0
    %520 = vmatpush.bf16.msra.mxu0 %v410
    %521 = vmatpush.bf16.msra.mxu0 %v409
    %522 = vmatpush.bf16.msra.mxu0 %v408
    %523 = vmatpush.bf16.msra.mxu0 %v407
    %524 = vmatpush.bf16.msra.mxu0 %v406
    %525 = vmatpush.bf16.msra.mxu0 %v405
    %526 = vmatpush.bf16.msra.mxu0 %v404
    %527 = vmatpush.bf16.msra.mxu0 %v403
    %528 = vmatmul.bf16.gmra.mxu0 %v173
    %v529 = vpop.f32.mrf.mxu0
    %v530 = vadd.f32 %v517, %v529
    %v531 = vpop.f32.mrf.mxu0
    %532 = vdwg.mxu0
    %533 = vmatpush.bf16.msra.mxu0 %v418
    %534 = vmatpush.bf16.msra.mxu0 %v417
    %535 = vmatpush.bf16.msra.mxu0 %v416
    %536 = vmatpush.bf16.msra.mxu0 %v415
    %537 = vmatpush.bf16.msra.mxu0 %v414
    %538 = vmatpush.bf16.msra.mxu0 %v413
    %539 = vmatpush.bf16.msra.mxu0 %v412
    %540 = vmatpush.bf16.msra.mxu0 %v411
    %541 = vmatmul.bf16.gmra.mxu0 %v174
    %v542 = vpop.f32.mrf.mxu0
    %v543 = vadd.f32 %v530, %v542
    %v544 = vpop.f32.mrf.mxu0
    %545 = vdwg.mxu0
    %546 = vmatpush.bf16.msra.mxu0 %v426
    %547 = vmatpush.bf16.msra.mxu0 %v425
    %548 = vmatpush.bf16.msra.mxu0 %v424
    %549 = vmatpush.bf16.msra.mxu0 %v423
    %550 = vmatpush.bf16.msra.mxu0 %v422
    %551 = vmatpush.bf16.msra.mxu0 %v421
    %552 = vmatpush.bf16.msra.mxu0 %v420
    %553 = vmatpush.bf16.msra.mxu0 %v419
    %554 = vmatmul.bf16.gmra.mxu0 %v175
    %v555 = vpop.f32.mrf.mxu0
    %v556 = vadd.f32 %v543, %v555
    %v557 = vpop.f32.mrf.mxu0
    %558 = vdwg.mxu0
    %559 = vmatpush.bf16.msra.mxu0 0
    %560 = vmatpush.bf16.msra.mxu0 0
    %561 = vmatpush.bf16.msra.mxu0 0
    %562 = vmatpush.bf16.msra.mxu0 0
    %563 = vmatpush.bf16.msra.mxu0 0
    %564 = vmatpush.bf16.msra.mxu0 0
    %565 = vmatpush.bf16.msra.mxu0 0
    %566 = vmatpush.bf16.msra.mxu0 %v427
    %567 = vmatmul.bf16.gmra.mxu0 %v479
    %v568 = vpop.f32.mrf.mxu0
    %v569 = vadd.f32 %v556, %v568
    %v570 = vpop.f32.mrf.mxu0
    %571 = vdwg.mxu0
    %v572 = vmax.f32 %v569, 0.0
    %v573 = vpack.c.bf16 %v572, %v572
    %v574 = vld [vmem:[#allocation4] sm:$0xf]
    %v575 = vld [vmem:[#allocation4 + $0x4] sm:$0xf]
    %v576 = vld [vmem:[#allocation4 + $0x8] sm:$0xf]
    %v577 = vld [vmem:[#allocation4 + $0xc] sm:$0xf]
    %v578 = vld [vmem:[#allocation4 + $0x10] sm:$0xf]
    %v579 = vld [vmem:[#allocation4 + $0x14] sm:$0xf]
    %v580 = vld [vmem:[#allocation4 + $0x18] sm:$0xf]
    %v581 = vld [vmem:[#allocation4 + $0x1c] sm:$0xf]
    %v582 = vld [vmem:[#allocation4 + $0x20] sm:$0xf]
    %v583 = vld [vmem:[#allocation4 + $0x24] sm:$0xf]
    %v584 = vld [vmem:[#allocation4 + $0x28] sm:$0xf]
    %v585 = vld [vmem:[#allocation4 + $0x2c] sm:$0xf]
    %v586 = vld [vmem:[#allocation4 + $0x30] sm:$0xf]
    %v587 = vld [vmem:[#allocation4 + $0x34] sm:$0xf]
    %v588 = vld [vmem:[#allocation4 + $0x38] sm:$0xf]
    %v589 = vld [vmem:[#allocation4 + $0x3c] sm:$0xf]
    %v590 = vld [vmem:[%s4] sm:$0x1]
    %v592 = vperm.slane %v590, 0
    %v610 = vunpack.c.l.b16 %v574
    %v611 = vunpack.c.l.b16 %v575
    %v612 = vunpack.c.l.b16 %v576
    %v613 = vunpack.c.l.b16 %v577
    %v614 = vunpack.c.l.b16 %v578
    %v615 = vunpack.c.l.b16 %v579
    %v616 = vunpack.c.l.b16 %v580
    %v617 = vunpack.c.l.b16 %v581
    %v618 = vunpack.c.l.b16 %v582
    %v619 = vunpack.c.l.b16 %v583
    %v620 = vunpack.c.l.b16 %v584
    %v621 = vunpack.c.l.b16 %v585
    %v622 = vunpack.c.l.b16 %v586
    %v623 = vunpack.c.l.b16 %v587
    %v624 = vunpack.c.l.b16 %v588
    %v625 = vunpack.c.l.b16 %v589
    %v626 = vpack.c.b16 %v611, %v610
    %v627 = vpack.c.b16 %v613, %v612
    %v628 = vpack.c.b16 %v615, %v614
    %v629 = vpack.c.b16 %v617, %v616
    %v630 = vpack.c.b16 %v619, %v618
    %v631 = vpack.c.b16 %v621, %v620
    %v632 = vpack.c.b16 %v623, %v622
    %v633 = vpack.c.b16 %v625, %v624
    %642 = vmatpush.bf16.msra.mxu0 %v633
    %643 = vmatpush.bf16.msra.mxu0 %v632
    %644 = vmatpush.bf16.msra.mxu0 %v631
    %645 = vmatpush.bf16.msra.mxu0 %v630
    %646 = vmatpush.bf16.msra.mxu0 %v629
    %647 = vmatpush.bf16.msra.mxu0 %v628
    %648 = vmatpush.bf16.msra.mxu0 %v627
    %649 = vmatpush.bf16.msra.mxu0 %v626
    %650 = vmatmul.bf16.gmra.mxu0 %v573
    %v651 = vpop.f32.mrf.mxu0
    %v652 = vadd.f32 %v592, %v651
    %v653 = vpop.f32.mrf.mxu0
    %654 = vdwg.mxu0
    %655 = vst [vmem:[%s5] sm:$0xff] %v652
    // Predicated region
    $region30: #{encoder_forward.1} parent=1 // pred_check
      _
    $region31: #{encoder_forward.1} parent=1 // pred_check_branch
      %657 = sbr.rel (0) target = $region33
    $region32: #{encoder_forward.1} parent=1 // pred_region
      _
    $region33: #{encoder_forward.1} parent=1 // pred_fallthru
      _
    // Predicated region
    $region34: #{encoder_forward.1} parent=1 // pred_check
      _
    $region35: #{encoder_forward.1} parent=1 // pred_check_branch
      %659 = sbr.rel (0) target = $region37
    $region36: #{encoder_forward.1} parent=1 // pred_region
      _
    $region37: #{encoder_forward.1} parent=1 // pred_fallthru
      _
    %660 = vsyncpa [#allocation3], 1
    %661 = vsyncpa [#allocation5], 1

</llo_original>
